<compile_context>
chip_gen: v5e
topology: v5e:2x2
jax: 0.10.0
libtpu: 0.0.40
codegen_flags: <defaults>
</compile_context>

<pallas_src>
import jax
import jax.numpy as jnp
from jax.experimental import pallas as pl
from jax.experimental.pallas import tpu as pltpu


def _pick_row_tile(L: int) -> int:
    """Rows per grid step. Must divide L and be a multiple of 8 (or equal L) for layout."""
    if L % 8 != 0:
        return L                     # full-dim block is always layout-legal
    for cand in (32, 16, 8):
        if L % cand == 0:
            return cand
    return 8


def _make_embed_kernel(L: int, TL: int, add_pos: bool):
    """Builds the kernel body. Ref order:
       (tok_ids SMEM, emb_table HBM, [pos block VMEM], out block VMEM, scratch VMEM, sems)
    """

    def kernel(*refs):
        if add_pos:
            tok_ref, emb_hbm, pos_ref, out_ref, scratch, sem = refs
        else:
            tok_ref, emb_hbm, out_ref, scratch, sem = refs
            pos_ref = None

        b = pl.program_id(0)
        j = pl.program_id(1)
        base = b * L + j * TL

        # Issue all TL row-gather DMAs first; they are in flight concurrently so the
        # per-row HBM latency overlaps across rows.
        for i in range(TL):
            tok = tok_ref[base + i]
            pltpu.make_async_copy(
                emb_hbm.at[pl.ds(tok, 1), :],
                scratch.at[pl.ds(i, 1), :],
                sem.at[i],
            ).start()

        # Wait for all of them (descriptor only needs matching transfer size).
        for i in range(TL):
            pltpu.make_async_copy(
                emb_hbm.at[pl.ds(0, 1), :],
                scratch.at[pl.ds(i, 1), :],
                sem.at[i],
            ).wait()

        if add_pos:
            out_ref[...] = scratch[...] + pos_ref[...].astype(out_ref.dtype)
        else:
            out_ref[...] = scratch[...]

    return kernel


def text_token_embedding(tokens, emb_table, pos_table,
                         skip_position_embedding: bool = False):
    """tokens: (B, L) int32 -> (B, L, D); matches TextTokenEmbedding.forward."""
    B, L = tokens.shape
    V, D = emb_table.shape
    max_len = pos_table.shape[0]
    out_dtype = emb_table.dtype

    if not skip_position_embedding and L > max_len:
        raise ValueError(f"sequence length {L} exceeds positional table length {max_len}")

    TL = _pick_row_tile(L)
    grid = (B, L // TL)
    tok_flat = tokens.reshape(B * L).astype(jnp.int32)

    add_pos = not skip_position_embedding
    kernel = _make_embed_kernel(L, TL, add_pos)

    in_specs = [pl.BlockSpec(memory_space=pl.ANY)]      # embedding table stays in HBM
    args = [tok_flat, emb_table]
    if add_pos:
        # Positions inside a row tile are contiguous -> plain blocked access, no gather.
        pos_used = pos_table[:L].astype(out_dtype)
        in_specs.append(pl.BlockSpec((TL, D), lambda b, j, tok: (j, 0)))
        args.append(pos_used)

    grid_spec = pltpu.PrefetchScalarGridSpec(
        num_scalar_prefetch=1,
        grid=grid,
        in_specs=in_specs,
        out_specs=pl.BlockSpec((None, TL, D), lambda b, j, tok: (b, j, 0)),
        scratch_shapes=[
            pltpu.VMEM((TL, D), out_dtype),          # gathered rows
            pltpu.SemaphoreType.DMA((TL,)),          # one sem per row DMA
        ],
    )

    out = pl.pallas_call(
        kernel,
        out_shape=jax.ShapeDtypeStruct((B, L, D), out_dtype),
        grid_spec=grid_spec,
        compiler_params=pltpu.CompilerParams(
            dimension_semantics=("parallel", "parallel")),
    )(*args)
    return out


if __name__ == "__main__":
    # Small synthetic config mirroring the module's Config fields:
    #   vocab_size = 64, text_token_embedding = 32, max_text_len = 16
    B, L = 2, 8
    VOCAB, D, MAX_LEN = 64, 32, 16

    key = jax.random.PRNGKey(0)
    k_tok, k_emb, k_pos = jax.random.split(key, 3)

    tokens = jax.random.randint(k_tok, (B, L), 0, VOCAB, dtype=jnp.int32)
    emb_table = jax.random.normal(k_emb, (VOCAB, D), dtype=jnp.float32) * 0.02
    pos_table = jax.random.normal(k_pos, (MAX_LEN, D), dtype=jnp.float32) * 0.02

    # Default path: token embedding + positional embedding.
    out = jax.block_until_ready(
        text_token_embedding(tokens, emb_table, pos_table,
                             skip_position_embedding=False))
    ref = jnp.take(emb_table, tokens, axis=0) + pos_table[:L][None, :, :]
    assert out.shape == (B, L, D)
    assert jnp.allclose(out, ref, atol=1e-5, rtol=1e-5), "pos path mismatch"

    # skip_position_embedding=True path: pure gather.
    out_skip = jax.block_until_ready(
        text_token_embedding(tokens, emb_table, pos_table,
                             skip_position_embedding=True))
    ref_skip = jnp.take(emb_table, tokens, axis=0)
    assert jnp.allclose(out_skip, ref_skip, atol=1e-5, rtol=1e-5), "skip path mismatch"

    print("KERNEL_OK")
</pallas_src>

<mosaic_0001>
module attributes {stable_mosaic.version = 11 : i64} {
  func.func @kernel(%arg0: i32, %arg1: i32, %arg2: memref<16xi32, #tpu.memory_space<smem>>, %arg3: memref<64x32xf32, #tpu.memory_space<any>>, %arg4: memref<8x32xf32, #tpu.memory_space<vmem>>, %arg5: memref<1x8x32xf32, #tpu.memory_space<vmem>>, %arg6: memref<8x32xf32, #tpu.memory_space<vmem>>, %arg7: memref<8x!tpu.dma_semaphore, #tpu.memory_space<semaphore_mem>>) attributes {dimension_semantics = [#tpu.dimension_semantics<parallel>, #tpu.dimension_semantics<parallel>], iteration_bounds = array<i64: 2, 1>, scalar_prefetch = 1 : i64, scratch_operands = 2 : i64, tpu.core_type = #tpu.core_type<tc>, window_params = [{}, {transform_indices = @transform_1, window_bounds = array<i64: 8, 32>}, {transform_indices = @transform_2, window_bounds = array<i64: 1, 8, 32>}]} {
    %c8_i32 = arith.constant 8 : i32
    %0 = arith.muli %arg0, %c8_i32 : i32
    %c8_i32_0 = arith.constant 8 : i32
    %1 = arith.muli %arg1, %c8_i32_0 : i32
    %2 = arith.addi %0, %1 : i32
    %c0_i32 = arith.constant 0 : i32
    %3 = arith.addi %2, %c0_i32 : i32
    %4 = arith.index_cast %3 : i32 to index
    %5 = memref.load %arg2[%4] : memref<16xi32, #tpu.memory_space<smem>>
    %c0_i32_1 = arith.constant 0 : i32
    %c0_i32_2 = arith.constant 0 : i32
    %6 = tpu.memref_slice %arg3[%5, %c0_i32_2] : memref<64x32xf32, #tpu.memory_space<any>> -> memref<1x32xf32, #tpu.memory_space<any>>
    %c0_i32_3 = arith.constant 0 : i32
    %c0_i32_4 = arith.constant 0 : i32
    %7 = tpu.memref_slice %arg6[%c0_i32_3, %c0_i32_4] : memref<8x32xf32, #tpu.memory_space<vmem>> -> memref<1x32xf32, #tpu.memory_space<vmem>>
    %8 = tpu.memref_slice %arg7[%c0_i32_1] : memref<8x!tpu.dma_semaphore, #tpu.memory_space<semaphore_mem>> -> memref<1x!tpu.dma_semaphore, #tpu.memory_space<semaphore_mem>>
    %9 = tpu.memref_squeeze %8 : memref<1x!tpu.dma_semaphore, #tpu.memory_space<semaphore_mem>> -> memref<!tpu.dma_semaphore, #tpu.memory_space<semaphore_mem>>
    tpu.enqueue_dma source(%6 : memref<1x32xf32, #tpu.memory_space<any>>) target(%7 : memref<1x32xf32, #tpu.memory_space<vmem>>) target_semaphore(%9 : memref<!tpu.dma_semaphore, #tpu.memory_space<semaphore_mem>>)
    %c1_i32 = arith.constant 1 : i32
    %10 = arith.addi %2, %c1_i32 : i32
    %11 = arith.index_cast %10 : i32 to index
    %12 = memref.load %arg2[%11] : memref<16xi32, #tpu.memory_space<smem>>
    %c1_i32_5 = arith.constant 1 : i32
    %c0_i32_6 = arith.constant 0 : i32
    %13 = tpu.memref_slice %arg3[%12, %c0_i32_6] : memref<64x32xf32, #tpu.memory_space<any>> -> memref<1x32xf32, #tpu.memory_space<any>>
    %c1_i32_7 = arith.constant 1 : i32
    %c0_i32_8 = arith.constant 0 : i32
    %14 = tpu.memref_slice %arg6[%c1_i32_7, %c0_i32_8] : memref<8x32xf32, #tpu.memory_space<vmem>> -> memref<1x32xf32, #tpu.memory_space<vmem>>
    %15 = tpu.memref_slice %arg7[%c1_i32_5] : memref<8x!tpu.dma_semaphore, #tpu.memory_space<semaphore_mem>> -> memref<1x!tpu.dma_semaphore, #tpu.memory_space<semaphore_mem>>
    %16 = tpu.memref_squeeze %15 : memref<1x!tpu.dma_semaphore, #tpu.memory_space<semaphore_mem>> -> memref<!tpu.dma_semaphore, #tpu.memory_space<semaphore_mem>>
    tpu.enqueue_dma source(%13 : memref<1x32xf32, #tpu.memory_space<any>>) target(%14 : memref<1x32xf32, #tpu.memory_space<vmem>>) target_semaphore(%16 : memref<!tpu.dma_semaphore, #tpu.memory_space<semaphore_mem>>)
    %c2_i32 = arith.constant 2 : i32
    %17 = arith.addi %2, %c2_i32 : i32
    %18 = arith.index_cast %17 : i32 to index
    %19 = memref.load %arg2[%18] : memref<16xi32, #tpu.memory_space<smem>>
    %c2_i32_9 = arith.constant 2 : i32
    %c0_i32_10 = arith.constant 0 : i32
    %20 = tpu.memref_slice %arg3[%19, %c0_i32_10] : memref<64x32xf32, #tpu.memory_space<any>> -> memref<1x32xf32, #tpu.memory_space<any>>
    %c2_i32_11 = arith.constant 2 : i32
    %c0_i32_12 = arith.constant 0 : i32
    %21 = tpu.memref_slice %arg6[%c2_i32_11, %c0_i32_12] : memref<8x32xf32, #tpu.memory_space<vmem>> -> memref<1x32xf32, #tpu.memory_space<vmem>>
    %22 = tpu.memref_slice %arg7[%c2_i32_9] : memref<8x!tpu.dma_semaphore, #tpu.memory_space<semaphore_mem>> -> memref<1x!tpu.dma_semaphore, #tpu.memory_space<semaphore_mem>>
    %23 = tpu.memref_squeeze %22 : memref<1x!tpu.dma_semaphore, #tpu.memory_space<semaphore_mem>> -> memref<!tpu.dma_semaphore, #tpu.memory_space<semaphore_mem>>
    tpu.enqueue_dma source(%20 : memref<1x32xf32, #tpu.memory_space<any>>) target(%21 : memref<1x32xf32, #tpu.memory_space<vmem>>) target_semaphore(%23 : memref<!tpu.dma_semaphore, #tpu.memory_space<semaphore_mem>>)
    %c3_i32 = arith.constant 3 : i32
    %24 = arith.addi %2, %c3_i32 : i32
    %25 = arith.index_cast %24 : i32 to index
    %26 = memref.load %arg2[%25] : memref<16xi32, #tpu.memory_space<smem>>
    %c3_i32_13 = arith.constant 3 : i32
    %c0_i32_14 = arith.constant 0 : i32
    %27 = tpu.memref_slice %arg3[%26, %c0_i32_14] : memref<64x32xf32, #tpu.memory_space<any>> -> memref<1x32xf32, #tpu.memory_space<any>>
    %c3_i32_15 = arith.constant 3 : i32
    %c0_i32_16 = arith.constant 0 : i32
    %28 = tpu.memref_slice %arg6[%c3_i32_15, %c0_i32_16] : memref<8x32xf32, #tpu.memory_space<vmem>> -> memref<1x32xf32, #tpu.memory_space<vmem>>
    %29 = tpu.memref_slice %arg7[%c3_i32_13] : memref<8x!tpu.dma_semaphore, #tpu.memory_space<semaphore_mem>> -> memref<1x!tpu.dma_semaphore, #tpu.memory_space<semaphore_mem>>
    %30 = tpu.memref_squeeze %29 : memref<1x!tpu.dma_semaphore, #tpu.memory_space<semaphore_mem>> -> memref<!tpu.dma_semaphore, #tpu.memory_space<semaphore_mem>>
    tpu.enqueue_dma source(%27 : memref<1x32xf32, #tpu.memory_space<any>>) target(%28 : memref<1x32xf32, #tpu.memory_space<vmem>>) target_semaphore(%30 : memref<!tpu.dma_semaphore, #tpu.memory_space<semaphore_mem>>)
    %c4_i32 = arith.constant 4 : i32
    %31 = arith.addi %2, %c4_i32 : i32
    %32 = arith.index_cast %31 : i32 to index
    %33 = memref.load %arg2[%32] : memref<16xi32, #tpu.memory_space<smem>>
    %c4_i32_17 = arith.constant 4 : i32
    %c0_i32_18 = arith.constant 0 : i32
    %34 = tpu.memref_slice %arg3[%33, %c0_i32_18] : memref<64x32xf32, #tpu.memory_space<any>> -> memref<1x32xf32, #tpu.memory_space<any>>
    %c4_i32_19 = arith.constant 4 : i32
    %c0_i32_20 = arith.constant 0 : i32
    %35 = tpu.memref_slice %arg6[%c4_i32_19, %c0_i32_20] : memref<8x32xf32, #tpu.memory_space<vmem>> -> memref<1x32xf32, #tpu.memory_space<vmem>>
    %36 = tpu.memref_slice %arg7[%c4_i32_17] : memref<8x!tpu.dma_semaphore, #tpu.memory_space<semaphore_mem>> -> memref<1x!tpu.dma_semaphore, #tpu.memory_space<semaphore_mem>>
    %37 = tpu.memref_squeeze %36 : memref<1x!tpu.dma_semaphore, #tpu.memory_space<semaphore_mem>> -> memref<!tpu.dma_semaphore, #tpu.memory_space<semaphore_mem>>
    tpu.enqueue_dma source(%34 : memref<1x32xf32, #tpu.memory_space<any>>) target(%35 : memref<1x32xf32, #tpu.memory_space<vmem>>) target_semaphore(%37 : memref<!tpu.dma_semaphore, #tpu.memory_space<semaphore_mem>>)
    %c5_i32 = arith.constant 5 : i32
    %38 = arith.addi %2, %c5_i32 : i32
    %39 = arith.index_cast %38 : i32 to index
    %40 = memref.load %arg2[%39] : memref<16xi32, #tpu.memory_space<smem>>
    %c5_i32_21 = arith.constant 5 : i32
    %c0_i32_22 = arith.constant 0 : i32
    %41 = tpu.memref_slice %arg3[%40, %c0_i32_22] : memref<64x32xf32, #tpu.memory_space<any>> -> memref<1x32xf32, #tpu.memory_space<any>>
    %c5_i32_23 = arith.constant 5 : i32
    %c0_i32_24 = arith.constant 0 : i32
    %42 = tpu.memref_slice %arg6[%c5_i32_23, %c0_i32_24] : memref<8x32xf32, #tpu.memory_space<vmem>> -> memref<1x32xf32, #tpu.memory_space<vmem>>
    %43 = tpu.memref_slice %arg7[%c5_i32_21] : memref<8x!tpu.dma_semaphore, #tpu.memory_space<semaphore_mem>> -> memref<1x!tpu.dma_semaphore, #tpu.memory_space<semaphore_mem>>
    %44 = tpu.memref_squeeze %43 : memref<1x!tpu.dma_semaphore, #tpu.memory_space<semaphore_mem>> -> memref<!tpu.dma_semaphore, #tpu.memory_space<semaphore_mem>>
    tpu.enqueue_dma source(%41 : memref<1x32xf32, #tpu.memory_space<any>>) target(%42 : memref<1x32xf32, #tpu.memory_space<vmem>>) target_semaphore(%44 : memref<!tpu.dma_semaphore, #tpu.memory_space<semaphore_mem>>)
    %c6_i32 = arith.constant 6 : i32
    %45 = arith.addi %2, %c6_i32 : i32
    %46 = arith.index_cast %45 : i32 to index
    %47 = memref.load %arg2[%46] : memref<16xi32, #tpu.memory_space<smem>>
    %c6_i32_25 = arith.constant 6 : i32
    %c0_i32_26 = arith.constant 0 : i32
    %48 = tpu.memref_slice %arg3[%47, %c0_i32_26] : memref<64x32xf32, #tpu.memory_space<any>> -> memref<1x32xf32, #tpu.memory_space<any>>
    %c6_i32_27 = arith.constant 6 : i32
    %c0_i32_28 = arith.constant 0 : i32
    %49 = tpu.memref_slice %arg6[%c6_i32_27, %c0_i32_28] : memref<8x32xf32, #tpu.memory_space<vmem>> -> memref<1x32xf32, #tpu.memory_space<vmem>>
    %50 = tpu.memref_slice %arg7[%c6_i32_25] : memref<8x!tpu.dma_semaphore, #tpu.memory_space<semaphore_mem>> -> memref<1x!tpu.dma_semaphore, #tpu.memory_space<semaphore_mem>>
    %51 = tpu.memref_squeeze %50 : memref<1x!tpu.dma_semaphore, #tpu.memory_space<semaphore_mem>> -> memref<!tpu.dma_semaphore, #tpu.memory_space<semaphore_mem>>
    tpu.enqueue_dma source(%48 : memref<1x32xf32, #tpu.memory_space<any>>) target(%49 : memref<1x32xf32, #tpu.memory_space<vmem>>) target_semaphore(%51 : memref<!tpu.dma_semaphore, #tpu.memory_space<semaphore_mem>>)
    %c7_i32 = arith.constant 7 : i32
    %52 = arith.addi %2, %c7_i32 : i32
    %53 = arith.index_cast %52 : i32 to index
    %54 = memref.load %arg2[%53] : memref<16xi32, #tpu.memory_space<smem>>
    %c7_i32_29 = arith.constant 7 : i32
    %c0_i32_30 = arith.constant 0 : i32
    %55 = tpu.memref_slice %arg3[%54, %c0_i32_30] : memref<64x32xf32, #tpu.memory_space<any>> -> memref<1x32xf32, #tpu.memory_space<any>>
    %c7_i32_31 = arith.constant 7 : i32
    %c0_i32_32 = arith.constant 0 : i32
    %56 = tpu.memref_slice %arg6[%c7_i32_31, %c0_i32_32] : memref<8x32xf32, #tpu.memory_space<vmem>> -> memref<1x32xf32, #tpu.memory_space<vmem>>
    %57 = tpu.memref_slice %arg7[%c7_i32_29] : memref<8x!tpu.dma_semaphore, #tpu.memory_space<semaphore_mem>> -> memref<1x!tpu.dma_semaphore, #tpu.memory_space<semaphore_mem>>
    %58 = tpu.memref_squeeze %57 : memref<1x!tpu.dma_semaphore, #tpu.memory_space<semaphore_mem>> -> memref<!tpu.dma_semaphore, #tpu.memory_space<semaphore_mem>>
    tpu.enqueue_dma source(%55 : memref<1x32xf32, #tpu.memory_space<any>>) target(%56 : memref<1x32xf32, #tpu.memory_space<vmem>>) target_semaphore(%58 : memref<!tpu.dma_semaphore, #tpu.memory_space<semaphore_mem>>)
    %c0_i32_33 = arith.constant 0 : i32
    %c0_i32_34 = arith.constant 0 : i32
    %c0_i32_35 = arith.constant 0 : i32
    %59 = tpu.memref_slice %arg3[%c0_i32_34, %c0_i32_35] : memref<64x32xf32, #tpu.memory_space<any>> -> memref<1x32xf32, #tpu.memory_space<any>>
    %c0_i32_36 = arith.constant 0 : i32
    %c0_i32_37 = arith.constant 0 : i32
    %60 = tpu.memref_slice %arg6[%c0_i32_36, %c0_i32_37] : memref<8x32xf32, #tpu.memory_space<vmem>> -> memref<1x32xf32, #tpu.memory_space<vmem>>
    %61 = tpu.memref_slice %arg7[%c0_i32_33] : memref<8x!tpu.dma_semaphore, #tpu.memory_space<semaphore_mem>> -> memref<1x!tpu.dma_semaphore, #tpu.memory_space<semaphore_mem>>
    %62 = tpu.memref_squeeze %61 : memref<1x!tpu.dma_semaphore, #tpu.memory_space<semaphore_mem>> -> memref<!tpu.dma_semaphore, #tpu.memory_space<semaphore_mem>>
    tpu.wait_dma2 semaphore(%62 : memref<!tpu.dma_semaphore, #tpu.memory_space<semaphore_mem>>) src(%59 : memref<1x32xf32, #tpu.memory_space<any>>) dst(%60 : memref<1x32xf32, #tpu.memory_space<vmem>>)
    %c1_i32_38 = arith.constant 1 : i32
    %c0_i32_39 = arith.constant 0 : i32
    %c0_i32_40 = arith.constant 0 : i32
    %63 = tpu.memref_slice %arg3[%c0_i32_39, %c0_i32_40] : memref<64x32xf32, #tpu.memory_space<any>> -> memref<1x32xf32, #tpu.memory_space<any>>
    %c1_i32_41 = arith.constant 1 : i32
    %c0_i32_42 = arith.constant 0 : i32
    %64 = tpu.memref_slice %arg6[%c1_i32_41, %c0_i32_42] : memref<8x32xf32, #tpu.memory_space<vmem>> -> memref<1x32xf32, #tpu.memory_space<vmem>>
    %65 = tpu.memref_slice %arg7[%c1_i32_38] : memref<8x!tpu.dma_semaphore, #tpu.memory_space<semaphore_mem>> -> memref<1x!tpu.dma_semaphore, #tpu.memory_space<semaphore_mem>>
    %66 = tpu.memref_squeeze %65 : memref<1x!tpu.dma_semaphore, #tpu.memory_space<semaphore_mem>> -> memref<!tpu.dma_semaphore, #tpu.memory_space<semaphore_mem>>
    tpu.wait_dma2 semaphore(%66 : memref<!tpu.dma_semaphore, #tpu.memory_space<semaphore_mem>>) src(%63 : memref<1x32xf32, #tpu.memory_space<any>>) dst(%64 : memref<1x32xf32, #tpu.memory_space<vmem>>)
    %c2_i32_43 = arith.constant 2 : i32
    %c0_i32_44 = arith.constant 0 : i32
    %c0_i32_45 = arith.constant 0 : i32
    %67 = tpu.memref_slice %arg3[%c0_i32_44, %c0_i32_45] : memref<64x32xf32, #tpu.memory_space<any>> -> memref<1x32xf32, #tpu.memory_space<any>>
    %c2_i32_46 = arith.constant 2 : i32
    %c0_i32_47 = arith.constant 0 : i32
    %68 = tpu.memref_slice %arg6[%c2_i32_46, %c0_i32_47] : memref<8x32xf32, #tpu.memory_space<vmem>> -> memref<1x32xf32, #tpu.memory_space<vmem>>
    %69 = tpu.memref_slice %arg7[%c2_i32_43] : memref<8x!tpu.dma_semaphore, #tpu.memory_space<semaphore_mem>> -> memref<1x!tpu.dma_semaphore, #tpu.memory_space<semaphore_mem>>
    %70 = tpu.memref_squeeze %69 : memref<1x!tpu.dma_semaphore, #tpu.memory_space<semaphore_mem>> -> memref<!tpu.dma_semaphore, #tpu.memory_space<semaphore_mem>>
    tpu.wait_dma2 semaphore(%70 : memref<!tpu.dma_semaphore, #tpu.memory_space<semaphore_mem>>) src(%67 : memref<1x32xf32, #tpu.memory_space<any>>) dst(%68 : memref<1x32xf32, #tpu.memory_space<vmem>>)
    %c3_i32_48 = arith.constant 3 : i32
    %c0_i32_49 = arith.constant 0 : i32
    %c0_i32_50 = arith.constant 0 : i32
    %71 = tpu.memref_slice %arg3[%c0_i32_49, %c0_i32_50] : memref<64x32xf32, #tpu.memory_space<any>> -> memref<1x32xf32, #tpu.memory_space<any>>
    %c3_i32_51 = arith.constant 3 : i32
    %c0_i32_52 = arith.constant 0 : i32
    %72 = tpu.memref_slice %arg6[%c3_i32_51, %c0_i32_52] : memref<8x32xf32, #tpu.memory_space<vmem>> -> memref<1x32xf32, #tpu.memory_space<vmem>>
    %73 = tpu.memref_slice %arg7[%c3_i32_48] : memref<8x!tpu.dma_semaphore, #tpu.memory_space<semaphore_mem>> -> memref<1x!tpu.dma_semaphore, #tpu.memory_space<semaphore_mem>>
    %74 = tpu.memref_squeeze %73 : memref<1x!tpu.dma_semaphore, #tpu.memory_space<semaphore_mem>> -> memref<!tpu.dma_semaphore, #tpu.memory_space<semaphore_mem>>
    tpu.wait_dma2 semaphore(%74 : memref<!tpu.dma_semaphore, #tpu.memory_space<semaphore_mem>>) src(%71 : memref<1x32xf32, #tpu.memory_space<any>>) dst(%72 : memref<1x32xf32, #tpu.memory_space<vmem>>)
    %c4_i32_53 = arith.constant 4 : i32
    %c0_i32_54 = arith.constant 0 : i32
    %c0_i32_55 = arith.constant 0 : i32
    %75 = tpu.memref_slice %arg3[%c0_i32_54, %c0_i32_55] : memref<64x32xf32, #tpu.memory_space<any>> -> memref<1x32xf32, #tpu.memory_space<any>>
    %c4_i32_56 = arith.constant 4 : i32
    %c0_i32_57 = arith.constant 0 : i32
    %76 = tpu.memref_slice %arg6[%c4_i32_56, %c0_i32_57] : memref<8x32xf32, #tpu.memory_space<vmem>> -> memref<1x32xf32, #tpu.memory_space<vmem>>
    %77 = tpu.memref_slice %arg7[%c4_i32_53] : memref<8x!tpu.dma_semaphore, #tpu.memory_space<semaphore_mem>> -> memref<1x!tpu.dma_semaphore, #tpu.memory_space<semaphore_mem>>
    %78 = tpu.memref_squeeze %77 : memref<1x!tpu.dma_semaphore, #tpu.memory_space<semaphore_mem>> -> memref<!tpu.dma_semaphore, #tpu.memory_space<semaphore_mem>>
    tpu.wait_dma2 semaphore(%78 : memref<!tpu.dma_semaphore, #tpu.memory_space<semaphore_mem>>) src(%75 : memref<1x32xf32, #tpu.memory_space<any>>) dst(%76 : memref<1x32xf32, #tpu.memory_space<vmem>>)
    %c5_i32_58 = arith.constant 5 : i32
    %c0_i32_59 = arith.constant 0 : i32
    %c0_i32_60 = arith.constant 0 : i32
    %79 = tpu.memref_slice %arg3[%c0_i32_59, %c0_i32_60] : memref<64x32xf32, #tpu.memory_space<any>> -> memref<1x32xf32, #tpu.memory_space<any>>
    %c5_i32_61 = arith.constant 5 : i32
    %c0_i32_62 = arith.constant 0 : i32
    %80 = tpu.memref_slice %arg6[%c5_i32_61, %c0_i32_62] : memref<8x32xf32, #tpu.memory_space<vmem>> -> memref<1x32xf32, #tpu.memory_space<vmem>>
    %81 = tpu.memref_slice %arg7[%c5_i32_58] : memref<8x!tpu.dma_semaphore, #tpu.memory_space<semaphore_mem>> -> memref<1x!tpu.dma_semaphore, #tpu.memory_space<semaphore_mem>>
    %82 = tpu.memref_squeeze %81 : memref<1x!tpu.dma_semaphore, #tpu.memory_space<semaphore_mem>> -> memref<!tpu.dma_semaphore, #tpu.memory_space<semaphore_mem>>
    tpu.wait_dma2 semaphore(%82 : memref<!tpu.dma_semaphore, #tpu.memory_space<semaphore_mem>>) src(%79 : memref<1x32xf32, #tpu.memory_space<any>>) dst(%80 : memref<1x32xf32, #tpu.memory_space<vmem>>)
    %c6_i32_63 = arith.constant 6 : i32
    %c0_i32_64 = arith.constant 0 : i32
    %c0_i32_65 = arith.constant 0 : i32
    %83 = tpu.memref_slice %arg3[%c0_i32_64, %c0_i32_65] : memref<64x32xf32, #tpu.memory_space<any>> -> memref<1x32xf32, #tpu.memory_space<any>>
    %c6_i32_66 = arith.constant 6 : i32
    %c0_i32_67 = arith.constant 0 : i32
    %84 = tpu.memref_slice %arg6[%c6_i32_66, %c0_i32_67] : memref<8x32xf32, #tpu.memory_space<vmem>> -> memref<1x32xf32, #tpu.memory_space<vmem>>
    %85 = tpu.memref_slice %arg7[%c6_i32_63] : memref<8x!tpu.dma_semaphore, #tpu.memory_space<semaphore_mem>> -> memref<1x!tpu.dma_semaphore, #tpu.memory_space<semaphore_mem>>
    %86 = tpu.memref_squeeze %85 : memref<1x!tpu.dma_semaphore, #tpu.memory_space<semaphore_mem>> -> memref<!tpu.dma_semaphore, #tpu.memory_space<semaphore_mem>>
    tpu.wait_dma2 semaphore(%86 : memref<!tpu.dma_semaphore, #tpu.memory_space<semaphore_mem>>) src(%83 : memref<1x32xf32, #tpu.memory_space<any>>) dst(%84 : memref<1x32xf32, #tpu.memory_space<vmem>>)
    %c7_i32_68 = arith.constant 7 : i32
    %c0_i32_69 = arith.constant 0 : i32
    %c0_i32_70 = arith.constant 0 : i32
    %87 = tpu.memref_slice %arg3[%c0_i32_69, %c0_i32_70] : memref<64x32xf32, #tpu.memory_space<any>> -> memref<1x32xf32, #tpu.memory_space<any>>
    %c7_i32_71 = arith.constant 7 : i32
    %c0_i32_72 = arith.constant 0 : i32
    %88 = tpu.memref_slice %arg6[%c7_i32_71, %c0_i32_72] : memref<8x32xf32, #tpu.memory_space<vmem>> -> memref<1x32xf32, #tpu.memory_space<vmem>>
    %89 = tpu.memref_slice %arg7[%c7_i32_68] : memref<8x!tpu.dma_semaphore, #tpu.memory_space<semaphore_mem>> -> memref<1x!tpu.dma_semaphore, #tpu.memory_space<semaphore_mem>>
    %90 = tpu.memref_squeeze %89 : memref<1x!tpu.dma_semaphore, #tpu.memory_space<semaphore_mem>> -> memref<!tpu.dma_semaphore, #tpu.memory_space<semaphore_mem>>
    tpu.wait_dma2 semaphore(%90 : memref<!tpu.dma_semaphore, #tpu.memory_space<semaphore_mem>>) src(%87 : memref<1x32xf32, #tpu.memory_space<any>>) dst(%88 : memref<1x32xf32, #tpu.memory_space<vmem>>)
    %c0 = arith.constant 0 : index
    %c0_73 = arith.constant 0 : index
    %91 = vector.load %arg6[%c0, %c0_73] : memref<8x32xf32, #tpu.memory_space<vmem>>, vector<8x32xf32>
    %c0_74 = arith.constant 0 : index
    %c0_75 = arith.constant 0 : index
    %92 = vector.load %arg4[%c0_74, %c0_75] : memref<8x32xf32, #tpu.memory_space<vmem>>, vector<8x32xf32>
    %93 = arith.addf %91, %92 : vector<8x32xf32>
    %c0_76 = arith.constant 0 : index
    %c0_77 = arith.constant 0 : index
    %c0_78 = arith.constant 0 : index
    %94 = vector.load %arg5[%c0_76, %c0_77, %c0_78] : memref<1x8x32xf32, #tpu.memory_space<vmem>>, vector<1x8x32xf32>
    %95 = vector.shape_cast %94 : vector<1x8x32xf32> to vector<8x32xf32>
    %96 = vector.shape_cast %93 : vector<8x32xf32> to vector<1x8x32xf32>
    tpu.vector_store %arg5[%c0_76, %c0_77, %c0_78], %96 {strides = array<i32>} : memref<1x8x32xf32, #tpu.memory_space<vmem>>, vector<1x8x32xf32>,
    return
  }
  func.func @transform_1(%arg0: i32, %arg1: i32, %arg2: memref<16xi32, #tpu.memory_space<smem>>) -> (i32, i32) {
    %c0_i32 = arith.constant 0 : i32
    %c0_i32_0 = arith.constant 0 : i32
    return %arg1, %c0_i32 : i32, i32
  }
  func.func @transform_2(%arg0: i32, %arg1: i32, %arg2: memref<16xi32, #tpu.memory_space<smem>>) -> (i32, i32, i32) {
    %c0_i32 = arith.constant 0 : i32
    %c0_i32_0 = arith.constant 0 : i32
    return %arg0, %arg1, %c0_i32 : i32, i32, i32
  }
}

</mosaic_0001>

<llo_original>
// kernel: tpu_custom_call.1
$region0: #{tpu_custom_call.1}
  #allocation0 [shape = 'u32[]', space=smem, size = 0x4, offset = 0x4, fixed_abs, tag = 'smem constant byte address 0x4 - core index']
  #allocation1 [shape = 'u32[72,128]{1,0:T(1,128)}', space=vmem, size = 0x9000, scoped, tag = 'internal scratch']
  #allocation2 [shape = 'f32[8,32]{1,0:T(8,128)}', space=vmem, size = 0x1000, scoped, tag = 'scratch operand']
  #allocation3 [shape = 's32[8]{0}', space=sflag, size = 0x20, scoped, tag = 'scratch operand']
  #allocation4 [shape = 's32[1]{0}', space=sflag, size = 0x4, scoped, tag = 'scoped memory for tpu_custom_call.1']
  #allocation5 [shape = 'u8[512]{0}', space=smem, size = 0x200, scoped, tag = 'prefetched SMEM operand 0']
  #allocation8 [shape = 's32[]', space=sflag, size = 0x4, offset = 0, fixed_abs, tag = 'sflag constant byte address 0x0 - dummy sync flag']
  #allocation9 [shape = 's32[]', space=sflag, size = 0x4, offset = 0, fixed_abs, tag = 'sflag constant byte address 0x0 - dummy sync flag']
  #allocation10 [shape = 's32[]', space=sflag, size = 0x4, offset = 0, fixed_abs, tag = 'sflag constant byte address 0x0 - dummy sync flag']
  #allocation11 [shape = 's32[]', space=sflag, size = 0x4, offset = 0, fixed_abs, tag = 'sflag constant byte address 0x0 - dummy sync flag']
  #allocation12 [shape = 's32[]', space=sflag, size = 0x4, offset = 0, fixed_abs, tag = 'sflag constant byte address 0x0 - dummy sync flag']
  #allocation13 [shape = 's32[]', space=sflag, size = 0x4, offset = 0, fixed_abs, tag = 'sflag constant byte address 0x0 - dummy sync flag']
  #allocation14 [shape = 's32[]', space=sflag, size = 0x4, offset = 0, fixed_abs, tag = 'sflag constant byte address 0x0 - dummy sync flag']
  #allocation15 [shape = 's32[]', space=sflag, size = 0x4, offset = 0, fixed_abs, tag = 'sflag constant byte address 0x0 - dummy sync flag']
  %s0 = inlined_call_operand.vmem [shape: s32[16], index: 0, kind: input, shape index: {}]
  %s1 = inlined_call_operand.vmem [shape: f32[64,32], index: 1, kind: input, shape index: {}]
  %s2 = inlined_call_operand.vmem [shape: f32[8,32], index: 2, kind: input, shape index: {}]
  %s3 = inlined_call_operand.hbm [shape: f32[2,8,32], index: 3, kind: output, shape index: {}]
  %s4 = sld [smem:[#allocation0]]
  $region277: #{tpu_custom_call.1} parent=0
    _
  %s6 = ssub.s32 1, %s4
  %s7 = scalar_select 0, %s6, %s4
  %s9 = sshll.u32 %s0, 4
  %s10 = int_to_ptr.vmem [resolvable:$true] %s9
  %12 = dma.vmem_to_smem %s10, 16, [#allocation5], [#allocation4]
  %14 = dma.done [#allocation4], 16
  %15 = sfence
  $region1: #{tpu_custom_call.1} parent=0
    #allocation6 [shape = 'u8[8192]{0}', space=vmem, size = 0x2000, scoped, tag = 'output window, operand 0']
    #allocation7 [shape = 's32[2]{0}', space=sflag, size = 0x8, scoped, tag = 'scoped memory for tpu_custom_call.1']
    %16 = vsyncpa [#allocation7], 0
    %s17 = scalar_lea.sflag [#allocation7], 1
    %18 = vsyncpa %s17, 0
    loop: start=0, step=1, limit=4
    $region2: #{tpu_custom_call.1} parent=1 // loop_pre_header
      _
    $region3: #{tpu_custom_call.1} parent=1 // loop_header
      %s20 = sphi 0, %s24
      %p21 = scmp.ge.s32.totalorder %s20, 4
      %s27 = sphi 0, %s39
      %s28 = sphi 0, %s35
      %s29 = sphi 0, %s27
      %s30 = sphi 0, %s28
      %s31 = sphi 0, %s29
      %s32 = sphi 0, %s30
      %s42 = sphi 0, %s44
      %s45 = sphi 0, %s42
      %s46 = sphi 0, %s45
      %s62 = sphi 0, %s46
      %s70 = sphi 0, %s72
      %s73 = sphi 0, %s70
      %s74 = sphi 0, %s73
      %s90 = sphi 0, %s74
    $region4: #{tpu_custom_call.1} parent=1 // loop_header_branch
      %23 = sbr.rel (%p21) target = $region8
    $region5: #{tpu_custom_call.1} parent=1 // loop_body
      %s25 = ssub.s32 %s20, 1
      %s26 = ssub.s32 %s20, 2
      %s33 = sadd.s32 1, %s28
      %p34 = scmp.ge.s32.totalorder %s33, 1
      %s35 = scalar_select %p34, 0, %s33
      %s36 = sadd.s32 1, %s27
      %s37 = scalar_select %p34, %s36, %s27
      %p38 = scmp.ge.s32.totalorder %s37, 2
      %s39 = scalar_select %p38, 0, %s37
      %s40 = ssub.s32 %s28, %s35
      %p41 = scmp.eq.s32.totalorder %s40, 0
      %s43 = sadd.s32 %s42, 1
      %s44 = scalar_select %p41, %s42, %s43
      %p47 = pneg %p41
      %p48 = scmp.eq.s32.totalorder %s20, 1
      %p49 = por %p47, %p48
      %p50 = scmp.ne.s32.totalorder %s42, %s45
      %p51 = scmp.eq.s32.totalorder %s20, 0
      %p52 = por %p50, %p51
      %p53 = scmp.ne.s32.totalorder %s42, %s45
      %p54 = scmp.eq.s32.totalorder %s25, 1
      %p55 = por %p53, %p54
      %p56 = scmp.ne.s32.totalorder %s45, %s46
      %p57 = scmp.eq.s32.totalorder %s25, 0
      %p58 = por %p56, %p57
      %p59 = scmp.ne.s32.totalorder %s45, %s46
      %p60 = scmp.eq.s32.totalorder %s26, 1
      %p61 = por %p59, %p60
      %p63 = scmp.ne.s32.totalorder %s46, %s62
      %p64 = scmp.eq.s32.totalorder %s26, 0
      %p65 = por %p63, %p64
      %s66 = ssub.s32 %s27, %s39
      %s67 = ssub.s32 %s28, %s35
      %s68 = sor.u32 %s66, %s67
      %p69 = scmp.eq.s32.totalorder %s68, 0
      %s71 = sadd.s32 %s70, 1
      %s72 = scalar_select %p69, %s70, %s71
      %p75 = pneg %p69
      %p76 = scmp.eq.s32.totalorder %s20, 1
      %p77 = por %p75, %p76
      %p78 = scmp.ne.s32.totalorder %s70, %s73
      %p79 = scmp.eq.s32.totalorder %s20, 0
      %p80 = por %p78, %p79
      %p81 = scmp.ne.s32.totalorder %s70, %s73
      %p82 = scmp.eq.s32.totalorder %s25, 1
      %p83 = por %p81, %p82
      %p84 = scmp.ne.s32.totalorder %s73, %s74
      %p85 = scmp.eq.s32.totalorder %s25, 0
      %p86 = por %p84, %p85
      %p87 = scmp.ne.s32.totalorder %s73, %s74
      %p88 = scmp.eq.s32.totalorder %s26, 1
      %p89 = por %p87, %p88
      %p91 = scmp.ne.s32.totalorder %s74, %s90
      %p92 = scmp.eq.s32.totalorder %s26, 0
      %p93 = por %p91, %p92
      %p94 = scmp.le.s32.totalorder 1, %s20
      %p95 = scmp.lt.s32.totalorder %s20, 3
      %p96 = pnand %p94, %p95
      %p97 = pneg %p96
      // Predicated region
      $region9: #{tpu_custom_call.1} parent=5 // pred_check
        _
      $region10: #{tpu_custom_call.1} parent=5 // pred_check_branch
        %99 = sbr.rel (%p96) target = $region12
      $region11: #{tpu_custom_call.1} parent=5 // pred_region
        %s100 = ssub.s32 %s20, 1
        // Predicated region
        $region13: #{tpu_custom_call.1} parent=11 // pred_check
          %p101 = pneg %p58
        $region14: #{tpu_custom_call.1} parent=11 // pred_check_branch
          %103 = sbr.rel (%p101) target = $region16
        $region15: #{tpu_custom_call.1} parent=11 // pred_region
          %p104 = scmp.lt.s32.totalorder %s30, 0
          %s105 = scalar_select %p104, %s30, 0
          %s106 = smul.addr %s105, 8
          %s107 = scalar_lea.vmem %s2, %s106
        $region16: #{tpu_custom_call.1} parent=11 // pred_fallthru
          _
      $region12: #{tpu_custom_call.1} parent=5 // pred_fallthru
        _
      %p108 = scmp.lt.s32.totalorder %s20, 2
      // Predicated region
      $region17: #{tpu_custom_call.1} parent=5 // pred_check
        %p109 = pneg %p108
      $region18: #{tpu_custom_call.1} parent=5 // pred_check_branch
        %111 = sbr.rel (%p109) target = $region20
      $region19: #{tpu_custom_call.1} parent=5 // pred_region
        _
      $region20: #{tpu_custom_call.1} parent=5 // pred_fallthru
        _
      %p112 = scmp.le.s32.totalorder 1, %s20
      %p113 = scmp.lt.s32.totalorder %s20, 3
      %p114 = pnand %p112, %p113
      %p115 = pneg %p114
      // Predicated region
      $region21: #{tpu_custom_call.1} parent=5 // pred_check
        _
      $region22: #{tpu_custom_call.1} parent=5 // pred_check_branch
        %117 = sbr.rel (%p114) target = $region24
      $region23: #{tpu_custom_call.1} parent=5 // pred_region
        %s118 = ssub.s32 %s20, 1
        %p119 = scmp.lt.s32.totalorder %s30, 0
        %s120 = scalar_select %p119, %s30, 0
        %s121 = smul.addr %s120, 8
        %s122 = scalar_lea.vmem %s2, %s121
        %p123 = pneg %p58
        %p124 = pneg %p55
        %p125 = pneg %p86
        %p126 = pneg %p83
        %s127 = sand.u32 %s73, 1
        %s128 = scalar_lea.sflag [#allocation7], %s127
        %s129 = sand.u32 %s73, 1
        %s130 = smul.addr %s129, 8
        %s131 = scalar_lea.vmem [#allocation6], %s130
        %p132 = scmp.lt.s32.totalorder %s30, 0
        %s133 = scalar_select %p132, %s30, 0
        %s134 = smul.addr %s133, 8
        %s135 = scalar_lea.vmem %s2, %s134
        %s136 = smul.u32 %s29, 8
        %s137 = smul.u32 %s30, 8
        %s138 = sadd.s32 %s136, %s137
        %s139 = sld [smem:[#allocation5 + %s138]]
        %s140 = scalar_lea.vmem %s1, %s139
        // Predicated region
        $region25: #{tpu_custom_call.1} parent=23 // pred_check
          _
        $region26: #{tpu_custom_call.1} parent=23 // pred_check_branch
          %142 = sbr.rel target = $region28
        $region27: #{tpu_custom_call.1} parent=23 // pred_region
          // Predicated region
          $region40: #{tpu_custom_call.1} parent=27 // pred_check
            _
          $region41: #{tpu_custom_call.1} parent=27 // pred_check_branch
            %158 = sbr.rel (0) target = $region43
          $region42: #{tpu_custom_call.1} parent=27 // pred_region
            %s160 = ssub.s32 2, 1
            loop: start=0, step=1, limit=1
            $region44: #{tpu_custom_call.1} parent=42 // loop_pre_header
              _
            $region45: #{tpu_custom_call.1} parent=42 // loop_header
              %s162 = sphi 0, %s166
              %p163 = scmp.ge.s32.totalorder %s162, 1
              %s167 = sphi %s140, %s140
              %s168 = sphi [#allocation2], [#allocation2]
            $region46: #{tpu_custom_call.1} parent=42 // loop_header_branch
              %165 = sbr.rel (%p163) target = $region50
            $region47: #{tpu_custom_call.1} parent=42 // loop_body
              %v169 = vld [vmem:[%s167] sm:%s160]
              %170 = vst [vmem:[%s168] sm:%s160] %v169
            $region48: #{tpu_custom_call.1} parent=42 // loop_footer
              %s166 = sadd.s32 1, %s162
            $region49: #{tpu_custom_call.1} parent=42 // loop_footer_branch
              %161 = sbr.rel target = $region45
            $region50: #{tpu_custom_call.1} parent=42 // loop_exit
              _
          $region43: #{tpu_custom_call.1} parent=27 // pred_fallthru
            _
        $region28: #{tpu_custom_call.1} parent=23 // pred_fallthru
          _
        // Predicated region
        $region29: #{tpu_custom_call.1} parent=23 // pred_check
          _
        $region30: #{tpu_custom_call.1} parent=23 // pred_check_branch
          %144 = sbr.rel (0) target = $region32
        $region31: #{tpu_custom_call.1} parent=23 // pred_region
          %s146 = ssub.s32 2, 1
          loop: start=0, step=1, limit=1
          $region33: #{tpu_custom_call.1} parent=31 // loop_pre_header
            _
          $region34: #{tpu_custom_call.1} parent=31 // loop_header
            %s148 = sphi 0, %s152
            %p149 = scmp.ge.s32.totalorder %s148, 1
            %s153 = sphi %s140, %s140
            %s154 = sphi [#allocation2], [#allocation2]
          $region35: #{tpu_custom_call.1} parent=31 // loop_header_branch
            %151 = sbr.rel (%p149) target = $region39
          $region36: #{tpu_custom_call.1} parent=31 // loop_body
            %v155 = vld [vmem:[%s153] sm:%s146]
            %156 = vst [vmem:[%s154] sm:%s146] %v155
          $region37: #{tpu_custom_call.1} parent=31 // loop_footer
            %s152 = sadd.s32 1, %s148
          $region38: #{tpu_custom_call.1} parent=31 // loop_footer_branch
            %147 = sbr.rel target = $region34
          $region39: #{tpu_custom_call.1} parent=31 // loop_exit
            _
        $region32: #{tpu_custom_call.1} parent=23 // pred_fallthru
          _
        // Predicated region
        $region51: #{tpu_custom_call.1} parent=23 // pred_check
          _
        $region52: #{tpu_custom_call.1} parent=23 // pred_check_branch
          %173 = sbr.rel (0) target = $region54
        $region53: #{tpu_custom_call.1} parent=23 // pred_region
          %174 = vsyncadd [#allocation3], 16
        $region54: #{tpu_custom_call.1} parent=23 // pred_fallthru
          _
        %s175 = sadd.s32 %s138, 1
        %s176 = sld [smem:[#allocation5 + %s175]]
        %s177 = scalar_lea.vmem %s1, %s176
        %s178 = scalar_lea.vmem [#allocation2], 1
        %s179 = scalar_lea.sflag [#allocation3], 1
        // Predicated region
        $region55: #{tpu_custom_call.1} parent=23 // pred_check
          _
        $region56: #{tpu_custom_call.1} parent=23 // pred_check_branch
          %181 = sbr.rel target = $region58
        $region57: #{tpu_custom_call.1} parent=23 // pred_region
          // Predicated region
          $region70: #{tpu_custom_call.1} parent=57 // pred_check
            _
          $region71: #{tpu_custom_call.1} parent=57 // pred_check_branch
            %197 = sbr.rel (0) target = $region73
          $region72: #{tpu_custom_call.1} parent=57 // pred_region
            %s199 = ssub.s32 2, 1
            loop: start=0, step=1, limit=1
            $region74: #{tpu_custom_call.1} parent=72 // loop_pre_header
              _
            $region75: #{tpu_custom_call.1} parent=72 // loop_header
              %s201 = sphi 0, %s205
              %p202 = scmp.ge.s32.totalorder %s201, 1
              %s206 = sphi %s177, %s177
              %s207 = sphi %s178, %s178
            $region76: #{tpu_custom_call.1} parent=72 // loop_header_branch
              %204 = sbr.rel (%p202) target = $region80
            $region77: #{tpu_custom_call.1} parent=72 // loop_body
              %v208 = vld [vmem:[%s206] sm:%s199]
              %209 = vst [vmem:[%s207] sm:%s199] %v208
            $region78: #{tpu_custom_call.1} parent=72 // loop_footer
              %s205 = sadd.s32 1, %s201
            $region79: #{tpu_custom_call.1} parent=72 // loop_footer_branch
              %200 = sbr.rel target = $region75
            $region80: #{tpu_custom_call.1} parent=72 // loop_exit
              _
          $region73: #{tpu_custom_call.1} parent=57 // pred_fallthru
            _
        $region58: #{tpu_custom_call.1} parent=23 // pred_fallthru
          _
        // Predicated region
        $region59: #{tpu_custom_call.1} parent=23 // pred_check
          _
        $region60: #{tpu_custom_call.1} parent=23 // pred_check_branch
          %183 = sbr.rel (0) target = $region62
        $region61: #{tpu_custom_call.1} parent=23 // pred_region
          %s185 = ssub.s32 2, 1
          loop: start=0, step=1, limit=1
          $region63: #{tpu_custom_call.1} parent=61 // loop_pre_header
            _
          $region64: #{tpu_custom_call.1} parent=61 // loop_header
            %s187 = sphi 0, %s191
            %p188 = scmp.ge.s32.totalorder %s187, 1
            %s192 = sphi %s177, %s177
            %s193 = sphi %s178, %s178
          $region65: #{tpu_custom_call.1} parent=61 // loop_header_branch
            %190 = sbr.rel (%p188) target = $region69
          $region66: #{tpu_custom_call.1} parent=61 // loop_body
            %v194 = vld [vmem:[%s192] sm:%s185]
            %195 = vst [vmem:[%s193] sm:%s185] %v194
          $region67: #{tpu_custom_call.1} parent=61 // loop_footer
            %s191 = sadd.s32 1, %s187
          $region68: #{tpu_custom_call.1} parent=61 // loop_footer_branch
            %186 = sbr.rel target = $region64
          $region69: #{tpu_custom_call.1} parent=61 // loop_exit
            _
        $region62: #{tpu_custom_call.1} parent=23 // pred_fallthru
          _
        // Predicated region
        $region81: #{tpu_custom_call.1} parent=23 // pred_check
          _
        $region82: #{tpu_custom_call.1} parent=23 // pred_check_branch
          %212 = sbr.rel (0) target = $region84
        $region83: #{tpu_custom_call.1} parent=23 // pred_region
          %213 = vsyncadd %s179, 16
        $region84: #{tpu_custom_call.1} parent=23 // pred_fallthru
          _
        %s214 = sadd.s32 %s138, 2
        %s215 = sld [smem:[#allocation5 + %s214]]
        %s216 = scalar_lea.vmem %s1, %s215
        %s217 = scalar_lea.vmem [#allocation2], 2
        %s218 = scalar_lea.sflag [#allocation3], 2
        // Predicated region
        $region85: #{tpu_custom_call.1} parent=23 // pred_check
          _
        $region86: #{tpu_custom_call.1} parent=23 // pred_check_branch
          %220 = sbr.rel target = $region88
        $region87: #{tpu_custom_call.1} parent=23 // pred_region
          // Predicated region
          $region100: #{tpu_custom_call.1} parent=87 // pred_check
            _
          $region101: #{tpu_custom_call.1} parent=87 // pred_check_branch
            %236 = sbr.rel (0) target = $region103
          $region102: #{tpu_custom_call.1} parent=87 // pred_region
            %s238 = ssub.s32 2, 1
            loop: start=0, step=1, limit=1
            $region104: #{tpu_custom_call.1} parent=102 // loop_pre_header
              _
            $region105: #{tpu_custom_call.1} parent=102 // loop_header
              %s240 = sphi 0, %s244
              %p241 = scmp.ge.s32.totalorder %s240, 1
              %s245 = sphi %s216, %s216
              %s246 = sphi %s217, %s217
            $region106: #{tpu_custom_call.1} parent=102 // loop_header_branch
              %243 = sbr.rel (%p241) target = $region110
            $region107: #{tpu_custom_call.1} parent=102 // loop_body
              %v247 = vld [vmem:[%s245] sm:%s238]
              %248 = vst [vmem:[%s246] sm:%s238] %v247
            $region108: #{tpu_custom_call.1} parent=102 // loop_footer
              %s244 = sadd.s32 1, %s240
            $region109: #{tpu_custom_call.1} parent=102 // loop_footer_branch
              %239 = sbr.rel target = $region105
            $region110: #{tpu_custom_call.1} parent=102 // loop_exit
              _
          $region103: #{tpu_custom_call.1} parent=87 // pred_fallthru
            _
        $region88: #{tpu_custom_call.1} parent=23 // pred_fallthru
          _
        // Predicated region
        $region89: #{tpu_custom_call.1} parent=23 // pred_check
          _
        $region90: #{tpu_custom_call.1} parent=23 // pred_check_branch
          %222 = sbr.rel (0) target = $region92
        $region91: #{tpu_custom_call.1} parent=23 // pred_region
          %s224 = ssub.s32 2, 1
          loop: start=0, step=1, limit=1
          $region93: #{tpu_custom_call.1} parent=91 // loop_pre_header
            _
          $region94: #{tpu_custom_call.1} parent=91 // loop_header
            %s226 = sphi 0, %s230
            %p227 = scmp.ge.s32.totalorder %s226, 1
            %s231 = sphi %s216, %s216
            %s232 = sphi %s217, %s217
          $region95: #{tpu_custom_call.1} parent=91 // loop_header_branch
            %229 = sbr.rel (%p227) target = $region99
          $region96: #{tpu_custom_call.1} parent=91 // loop_body
            %v233 = vld [vmem:[%s231] sm:%s224]
            %234 = vst [vmem:[%s232] sm:%s224] %v233
          $region97: #{tpu_custom_call.1} parent=91 // loop_footer
            %s230 = sadd.s32 1, %s226
          $region98: #{tpu_custom_call.1} parent=91 // loop_footer_branch
            %225 = sbr.rel target = $region94
          $region99: #{tpu_custom_call.1} parent=91 // loop_exit
            _
        $region92: #{tpu_custom_call.1} parent=23 // pred_fallthru
          _
        // Predicated region
        $region111: #{tpu_custom_call.1} parent=23 // pred_check
          _
        $region112: #{tpu_custom_call.1} parent=23 // pred_check_branch
          %251 = sbr.rel (0) target = $region114
        $region113: #{tpu_custom_call.1} parent=23 // pred_region
          %252 = vsyncadd %s218, 16
        $region114: #{tpu_custom_call.1} parent=23 // pred_fallthru
          _
        %s253 = sadd.s32 %s138, 3
        %s254 = sld [smem:[#allocation5 + %s253]]
        %s255 = scalar_lea.vmem %s1, %s254
        %s256 = scalar_lea.vmem [#allocation2], 3
        %s257 = scalar_lea.sflag [#allocation3], 3
        // Predicated region
        $region115: #{tpu_custom_call.1} parent=23 // pred_check
          _
        $region116: #{tpu_custom_call.1} parent=23 // pred_check_branch
          %259 = sbr.rel target = $region118
        $region117: #{tpu_custom_call.1} parent=23 // pred_region
          // Predicated region
          $region130: #{tpu_custom_call.1} parent=117 // pred_check
            _
          $region131: #{tpu_custom_call.1} parent=117 // pred_check_branch
            %275 = sbr.rel (0) target = $region133
          $region132: #{tpu_custom_call.1} parent=117 // pred_region
            %s277 = ssub.s32 2, 1
            loop: start=0, step=1, limit=1
            $region134: #{tpu_custom_call.1} parent=132 // loop_pre_header
              _
            $region135: #{tpu_custom_call.1} parent=132 // loop_header
              %s279 = sphi 0, %s283
              %p280 = scmp.ge.s32.totalorder %s279, 1
              %s284 = sphi %s255, %s255
              %s285 = sphi %s256, %s256
            $region136: #{tpu_custom_call.1} parent=132 // loop_header_branch
              %282 = sbr.rel (%p280) target = $region140
            $region137: #{tpu_custom_call.1} parent=132 // loop_body
              %v286 = vld [vmem:[%s284] sm:%s277]
              %287 = vst [vmem:[%s285] sm:%s277] %v286
            $region138: #{tpu_custom_call.1} parent=132 // loop_footer
              %s283 = sadd.s32 1, %s279
            $region139: #{tpu_custom_call.1} parent=132 // loop_footer_branch
              %278 = sbr.rel target = $region135
            $region140: #{tpu_custom_call.1} parent=132 // loop_exit
              _
          $region133: #{tpu_custom_call.1} parent=117 // pred_fallthru
            _
        $region118: #{tpu_custom_call.1} parent=23 // pred_fallthru
          _
        // Predicated region
        $region119: #{tpu_custom_call.1} parent=23 // pred_check
          _
        $region120: #{tpu_custom_call.1} parent=23 // pred_check_branch
          %261 = sbr.rel (0) target = $region122
        $region121: #{tpu_custom_call.1} parent=23 // pred_region
          %s263 = ssub.s32 2, 1
          loop: start=0, step=1, limit=1
          $region123: #{tpu_custom_call.1} parent=121 // loop_pre_header
            _
          $region124: #{tpu_custom_call.1} parent=121 // loop_header
            %s265 = sphi 0, %s269
            %p266 = scmp.ge.s32.totalorder %s265, 1
            %s270 = sphi %s255, %s255
            %s271 = sphi %s256, %s256
          $region125: #{tpu_custom_call.1} parent=121 // loop_header_branch
            %268 = sbr.rel (%p266) target = $region129
          $region126: #{tpu_custom_call.1} parent=121 // loop_body
            %v272 = vld [vmem:[%s270] sm:%s263]
            %273 = vst [vmem:[%s271] sm:%s263] %v272
          $region127: #{tpu_custom_call.1} parent=121 // loop_footer
            %s269 = sadd.s32 1, %s265
          $region128: #{tpu_custom_call.1} parent=121 // loop_footer_branch
            %264 = sbr.rel target = $region124
          $region129: #{tpu_custom_call.1} parent=121 // loop_exit
            _
        $region122: #{tpu_custom_call.1} parent=23 // pred_fallthru
          _
        // Predicated region
        $region141: #{tpu_custom_call.1} parent=23 // pred_check
          _
        $region142: #{tpu_custom_call.1} parent=23 // pred_check_branch
          %290 = sbr.rel (0) target = $region144
        $region143: #{tpu_custom_call.1} parent=23 // pred_region
          %291 = vsyncadd %s257, 16
        $region144: #{tpu_custom_call.1} parent=23 // pred_fallthru
          _
        %s292 = sadd.s32 %s138, 4
        %s293 = sld [smem:[#allocation5 + %s292]]
        %s294 = scalar_lea.vmem %s1, %s293
        %s295 = scalar_lea.vmem [#allocation2], 4
        %s296 = scalar_lea.sflag [#allocation3], 4
        // Predicated region
        $region145: #{tpu_custom_call.1} parent=23 // pred_check
          _
        $region146: #{tpu_custom_call.1} parent=23 // pred_check_branch
          %298 = sbr.rel target = $region148
        $region147: #{tpu_custom_call.1} parent=23 // pred_region
          // Predicated region
          $region160: #{tpu_custom_call.1} parent=147 // pred_check
            _
          $region161: #{tpu_custom_call.1} parent=147 // pred_check_branch
            %314 = sbr.rel (0) target = $region163
          $region162: #{tpu_custom_call.1} parent=147 // pred_region
            %s316 = ssub.s32 2, 1
            loop: start=0, step=1, limit=1
            $region164: #{tpu_custom_call.1} parent=162 // loop_pre_header
              _
            $region165: #{tpu_custom_call.1} parent=162 // loop_header
              %s318 = sphi 0, %s322
              %p319 = scmp.ge.s32.totalorder %s318, 1
              %s323 = sphi %s294, %s294
              %s324 = sphi %s295, %s295
            $region166: #{tpu_custom_call.1} parent=162 // loop_header_branch
              %321 = sbr.rel (%p319) target = $region170
            $region167: #{tpu_custom_call.1} parent=162 // loop_body
              %v325 = vld [vmem:[%s323] sm:%s316]
              %326 = vst [vmem:[%s324] sm:%s316] %v325
            $region168: #{tpu_custom_call.1} parent=162 // loop_footer
              %s322 = sadd.s32 1, %s318
            $region169: #{tpu_custom_call.1} parent=162 // loop_footer_branch
              %317 = sbr.rel target = $region165
            $region170: #{tpu_custom_call.1} parent=162 // loop_exit
              _
          $region163: #{tpu_custom_call.1} parent=147 // pred_fallthru
            _
        $region148: #{tpu_custom_call.1} parent=23 // pred_fallthru
          _
        // Predicated region
        $region149: #{tpu_custom_call.1} parent=23 // pred_check
          _
        $region150: #{tpu_custom_call.1} parent=23 // pred_check_branch
          %300 = sbr.rel (0) target = $region152
        $region151: #{tpu_custom_call.1} parent=23 // pred_region
          %s302 = ssub.s32 2, 1
          loop: start=0, step=1, limit=1
          $region153: #{tpu_custom_call.1} parent=151 // loop_pre_header
            _
          $region154: #{tpu_custom_call.1} parent=151 // loop_header
            %s304 = sphi 0, %s308
            %p305 = scmp.ge.s32.totalorder %s304, 1
            %s309 = sphi %s294, %s294
            %s310 = sphi %s295, %s295
          $region155: #{tpu_custom_call.1} parent=151 // loop_header_branch
            %307 = sbr.rel (%p305) target = $region159
          $region156: #{tpu_custom_call.1} parent=151 // loop_body
            %v311 = vld [vmem:[%s309] sm:%s302]
            %312 = vst [vmem:[%s310] sm:%s302] %v311
          $region157: #{tpu_custom_call.1} parent=151 // loop_footer
            %s308 = sadd.s32 1, %s304
          $region158: #{tpu_custom_call.1} parent=151 // loop_footer_branch
            %303 = sbr.rel target = $region154
          $region159: #{tpu_custom_call.1} parent=151 // loop_exit
            _
        $region152: #{tpu_custom_call.1} parent=23 // pred_fallthru
          _
        // Predicated region
        $region171: #{tpu_custom_call.1} parent=23 // pred_check
          _
        $region172: #{tpu_custom_call.1} parent=23 // pred_check_branch
          %329 = sbr.rel (0) target = $region174
        $region173: #{tpu_custom_call.1} parent=23 // pred_region
          %330 = vsyncadd %s296, 16
        $region174: #{tpu_custom_call.1} parent=23 // pred_fallthru
          _
        %s331 = sadd.s32 %s138, 5
        %s332 = sld [smem:[#allocation5 + %s331]]
        %s333 = scalar_lea.vmem %s1, %s332
        %s334 = scalar_lea.vmem [#allocation2], 5
        %s335 = scalar_lea.sflag [#allocation3], 5
        // Predicated region
        $region175: #{tpu_custom_call.1} parent=23 // pred_check
          _
        $region176: #{tpu_custom_call.1} parent=23 // pred_check_branch
          %337 = sbr.rel target = $region178
        $region177: #{tpu_custom_call.1} parent=23 // pred_region
          // Predicated region
          $region190: #{tpu_custom_call.1} parent=177 // pred_check
            _
          $region191: #{tpu_custom_call.1} parent=177 // pred_check_branch
            %353 = sbr.rel (0) target = $region193
          $region192: #{tpu_custom_call.1} parent=177 // pred_region
            %s355 = ssub.s32 2, 1
            loop: start=0, step=1, limit=1
            $region194: #{tpu_custom_call.1} parent=192 // loop_pre_header
              _
            $region195: #{tpu_custom_call.1} parent=192 // loop_header
              %s357 = sphi 0, %s361
              %p358 = scmp.ge.s32.totalorder %s357, 1
              %s362 = sphi %s333, %s333
              %s363 = sphi %s334, %s334
            $region196: #{tpu_custom_call.1} parent=192 // loop_header_branch
              %360 = sbr.rel (%p358) target = $region200
            $region197: #{tpu_custom_call.1} parent=192 // loop_body
              %v364 = vld [vmem:[%s362] sm:%s355]
              %365 = vst [vmem:[%s363] sm:%s355] %v364
            $region198: #{tpu_custom_call.1} parent=192 // loop_footer
              %s361 = sadd.s32 1, %s357
            $region199: #{tpu_custom_call.1} parent=192 // loop_footer_branch
              %356 = sbr.rel target = $region195
            $region200: #{tpu_custom_call.1} parent=192 // loop_exit
              _
          $region193: #{tpu_custom_call.1} parent=177 // pred_fallthru
            _
        $region178: #{tpu_custom_call.1} parent=23 // pred_fallthru
          _
        // Predicated region
        $region179: #{tpu_custom_call.1} parent=23 // pred_check
          _
        $region180: #{tpu_custom_call.1} parent=23 // pred_check_branch
          %339 = sbr.rel (0) target = $region182
        $region181: #{tpu_custom_call.1} parent=23 // pred_region
          %s341 = ssub.s32 2, 1
          loop: start=0, step=1, limit=1
          $region183: #{tpu_custom_call.1} parent=181 // loop_pre_header
            _
          $region184: #{tpu_custom_call.1} parent=181 // loop_header
            %s343 = sphi 0, %s347
            %p344 = scmp.ge.s32.totalorder %s343, 1
            %s348 = sphi %s333, %s333
            %s349 = sphi %s334, %s334
          $region185: #{tpu_custom_call.1} parent=181 // loop_header_branch
            %346 = sbr.rel (%p344) target = $region189
          $region186: #{tpu_custom_call.1} parent=181 // loop_body
            %v350 = vld [vmem:[%s348] sm:%s341]
            %351 = vst [vmem:[%s349] sm:%s341] %v350
          $region187: #{tpu_custom_call.1} parent=181 // loop_footer
            %s347 = sadd.s32 1, %s343
          $region188: #{tpu_custom_call.1} parent=181 // loop_footer_branch
            %342 = sbr.rel target = $region184
          $region189: #{tpu_custom_call.1} parent=181 // loop_exit
            _
        $region182: #{tpu_custom_call.1} parent=23 // pred_fallthru
          _
        // Predicated region
        $region201: #{tpu_custom_call.1} parent=23 // pred_check
          _
        $region202: #{tpu_custom_call.1} parent=23 // pred_check_branch
          %368 = sbr.rel (0) target = $region204
        $region203: #{tpu_custom_call.1} parent=23 // pred_region
          %369 = vsyncadd %s335, 16
        $region204: #{tpu_custom_call.1} parent=23 // pred_fallthru
          _
        %s370 = sadd.s32 %s138, 6
        %s371 = sld [smem:[#allocation5 + %s370]]
        %s372 = scalar_lea.vmem %s1, %s371
        %s373 = scalar_lea.vmem [#allocation2], 6
        %s374 = scalar_lea.sflag [#allocation3], 6
        // Predicated region
        $region205: #{tpu_custom_call.1} parent=23 // pred_check
          _
        $region206: #{tpu_custom_call.1} parent=23 // pred_check_branch
          %376 = sbr.rel target = $region208
        $region207: #{tpu_custom_call.1} parent=23 // pred_region
          // Predicated region
          $region220: #{tpu_custom_call.1} parent=207 // pred_check
            _
          $region221: #{tpu_custom_call.1} parent=207 // pred_check_branch
            %392 = sbr.rel (0) target = $region223
          $region222: #{tpu_custom_call.1} parent=207 // pred_region
            %s394 = ssub.s32 2, 1
            loop: start=0, step=1, limit=1
            $region224: #{tpu_custom_call.1} parent=222 // loop_pre_header
              _
            $region225: #{tpu_custom_call.1} parent=222 // loop_header
              %s396 = sphi 0, %s400
              %p397 = scmp.ge.s32.totalorder %s396, 1
              %s401 = sphi %s372, %s372
              %s402 = sphi %s373, %s373
            $region226: #{tpu_custom_call.1} parent=222 // loop_header_branch
              %399 = sbr.rel (%p397) target = $region230
            $region227: #{tpu_custom_call.1} parent=222 // loop_body
              %v403 = vld [vmem:[%s401] sm:%s394]
              %404 = vst [vmem:[%s402] sm:%s394] %v403
            $region228: #{tpu_custom_call.1} parent=222 // loop_footer
              %s400 = sadd.s32 1, %s396
            $region229: #{tpu_custom_call.1} parent=222 // loop_footer_branch
              %395 = sbr.rel target = $region225
            $region230: #{tpu_custom_call.1} parent=222 // loop_exit
              _
          $region223: #{tpu_custom_call.1} parent=207 // pred_fallthru
            _
        $region208: #{tpu_custom_call.1} parent=23 // pred_fallthru
          _
        // Predicated region
        $region209: #{tpu_custom_call.1} parent=23 // pred_check
          _
        $region210: #{tpu_custom_call.1} parent=23 // pred_check_branch
          %378 = sbr.rel (0) target = $region212
        $region211: #{tpu_custom_call.1} parent=23 // pred_region
          %s380 = ssub.s32 2, 1
          loop: start=0, step=1, limit=1
          $region213: #{tpu_custom_call.1} parent=211 // loop_pre_header
            _
          $region214: #{tpu_custom_call.1} parent=211 // loop_header
            %s382 = sphi 0, %s386
            %p383 = scmp.ge.s32.totalorder %s382, 1
            %s387 = sphi %s372, %s372
            %s388 = sphi %s373, %s373
          $region215: #{tpu_custom_call.1} parent=211 // loop_header_branch
            %385 = sbr.rel (%p383) target = $region219
          $region216: #{tpu_custom_call.1} parent=211 // loop_body
            %v389 = vld [vmem:[%s387] sm:%s380]
            %390 = vst [vmem:[%s388] sm:%s380] %v389
          $region217: #{tpu_custom_call.1} parent=211 // loop_footer
            %s386 = sadd.s32 1, %s382
          $region218: #{tpu_custom_call.1} parent=211 // loop_footer_branch
            %381 = sbr.rel target = $region214
          $region219: #{tpu_custom_call.1} parent=211 // loop_exit
            _
        $region212: #{tpu_custom_call.1} parent=23 // pred_fallthru
          _
        // Predicated region
        $region231: #{tpu_custom_call.1} parent=23 // pred_check
          _
        $region232: #{tpu_custom_call.1} parent=23 // pred_check_branch
          %407 = sbr.rel (0) target = $region234
        $region233: #{tpu_custom_call.1} parent=23 // pred_region
          %408 = vsyncadd %s374, 16
        $region234: #{tpu_custom_call.1} parent=23 // pred_fallthru
          _
        %s409 = sadd.s32 %s138, 7
        %s410 = sld [smem:[#allocation5 + %s409]]
        %s411 = scalar_lea.vmem %s1, %s410
        %s412 = scalar_lea.vmem [#allocation2], 7
        %s413 = scalar_lea.sflag [#allocation3], 7
        // Predicated region
        $region235: #{tpu_custom_call.1} parent=23 // pred_check
          _
        $region236: #{tpu_custom_call.1} parent=23 // pred_check_branch
          %415 = sbr.rel target = $region238
        $region237: #{tpu_custom_call.1} parent=23 // pred_region
          // Predicated region
          $region250: #{tpu_custom_call.1} parent=237 // pred_check
            _
          $region251: #{tpu_custom_call.1} parent=237 // pred_check_branch
            %431 = sbr.rel (0) target = $region253
          $region252: #{tpu_custom_call.1} parent=237 // pred_region
            %s433 = ssub.s32 2, 1
            loop: start=0, step=1, limit=1
            $region254: #{tpu_custom_call.1} parent=252 // loop_pre_header
              _
            $region255: #{tpu_custom_call.1} parent=252 // loop_header
              %s435 = sphi 0, %s439
              %p436 = scmp.ge.s32.totalorder %s435, 1
              %s440 = sphi %s411, %s411
              %s441 = sphi %s412, %s412
            $region256: #{tpu_custom_call.1} parent=252 // loop_header_branch
              %438 = sbr.rel (%p436) target = $region260
            $region257: #{tpu_custom_call.1} parent=252 // loop_body
              %v442 = vld [vmem:[%s440] sm:%s433]
              %443 = vst [vmem:[%s441] sm:%s433] %v442
            $region258: #{tpu_custom_call.1} parent=252 // loop_footer
              %s439 = sadd.s32 1, %s435
            $region259: #{tpu_custom_call.1} parent=252 // loop_footer_branch
              %434 = sbr.rel target = $region255
            $region260: #{tpu_custom_call.1} parent=252 // loop_exit
              _
          $region253: #{tpu_custom_call.1} parent=237 // pred_fallthru
            _
        $region238: #{tpu_custom_call.1} parent=23 // pred_fallthru
          _
        // Predicated region
        $region239: #{tpu_custom_call.1} parent=23 // pred_check
          _
        $region240: #{tpu_custom_call.1} parent=23 // pred_check_branch
          %417 = sbr.rel (0) target = $region242
        $region241: #{tpu_custom_call.1} parent=23 // pred_region
          %s419 = ssub.s32 2, 1
          loop: start=0, step=1, limit=1
          $region243: #{tpu_custom_call.1} parent=241 // loop_pre_header
            _
          $region244: #{tpu_custom_call.1} parent=241 // loop_header
            %s421 = sphi 0, %s425
            %p422 = scmp.ge.s32.totalorder %s421, 1
            %s426 = sphi %s411, %s411
            %s427 = sphi %s412, %s412
          $region245: #{tpu_custom_call.1} parent=241 // loop_header_branch
            %424 = sbr.rel (%p422) target = $region249
          $region246: #{tpu_custom_call.1} parent=241 // loop_body
            %v428 = vld [vmem:[%s426] sm:%s419]
            %429 = vst [vmem:[%s427] sm:%s419] %v428
          $region247: #{tpu_custom_call.1} parent=241 // loop_footer
            %s425 = sadd.s32 1, %s421
          $region248: #{tpu_custom_call.1} parent=241 // loop_footer_branch
            %420 = sbr.rel target = $region244
          $region249: #{tpu_custom_call.1} parent=241 // loop_exit
            _
        $region242: #{tpu_custom_call.1} parent=23 // pred_fallthru
          _
        // Predicated region
        $region261: #{tpu_custom_call.1} parent=23 // pred_check
          _
        $region262: #{tpu_custom_call.1} parent=23 // pred_check_branch
          %446 = sbr.rel (0) target = $region264
        $region263: #{tpu_custom_call.1} parent=23 // pred_region
          %447 = vsyncadd %s413, 16
        $region264: #{tpu_custom_call.1} parent=23 // pred_fallthru
          _
        %s448 = smul.u32 1, 1
        %s449 = sshll.u32 %s448, 4
        %450 = dma.done [#allocation3], %s449
        %s451 = sshll.u32 %s448, 4
        %452 = dma.done %s179, %s451
        %s453 = sshll.u32 %s448, 4
        %454 = dma.done %s218, %s453
        %s455 = sshll.u32 %s448, 4
        %456 = dma.done %s257, %s455
        %s457 = sshll.u32 %s448, 4
        %458 = dma.done %s296, %s457
        %s459 = sshll.u32 %s448, 4
        %460 = dma.done %s335, %s459
        %s461 = sshll.u32 %s448, 4
        %462 = dma.done %s374, %s461
        %s463 = sshll.u32 %s448, 4
        %464 = dma.done %s413, %s463
        %v465 = vld [vmem:[#allocation2] sm:$0xff]
        %v466 = vld [vmem:[%s135] sm:$0xff]
        %v467 = vadd.f32 %v465, %v466
        %vm468 = vcmask 261120
        %469 = vst.msk [vmem:[%s131] sm:$0xff] %vm468, %v467
        %s470 = sand.u32 %s73, 1
        %s471 = scalar_lea.sflag [#allocation7], %s470
        %s472 = sand.u32 %s73, 1
        %s473 = smul.addr %s472, 8
        %s474 = scalar_lea.vmem [#allocation6], %s473
        // Predicated region
        $region265: #{tpu_custom_call.1} parent=23 // pred_check
          %p475 = pneg %p83
        $region266: #{tpu_custom_call.1} parent=23 // pred_check_branch
          %477 = sbr.rel (%p475) target = $region268
        $region267: #{tpu_custom_call.1} parent=23 // pred_region
          %479 = vsyncadd %s471, 0
          %s480 = sadd.s32 %s30, %s29
          %s481 = smul.addr %s480, 8
          %s482 = scalar_lea.hbm %s3, %s481
          %s484 = sshll.u32 %s474, 4
          %s485 = int_to_ptr.vmem [resolvable:$true] %s484
          %s486 = sshll.u32 %s482, 4
          %s487 = int_to_ptr.hbm [resolvable:$true] %s486
          %489 = dma.vmem_to_hbm [thread:$0]  %s485, 128, %s487, %s471
        $region268: #{tpu_custom_call.1} parent=23 // pred_fallthru
          _
      $region24: #{tpu_custom_call.1} parent=5 // pred_fallthru
        _
      %p490 = scmp.le.s32.totalorder 2, %s20
      // Predicated region
      $region269: #{tpu_custom_call.1} parent=5 // pred_check
        %p491 = pneg %p490
      $region270: #{tpu_custom_call.1} parent=5 // pred_check_branch
        %493 = sbr.rel (%p491) target = $region272
      $region271: #{tpu_custom_call.1} parent=5 // pred_region
        %s494 = ssub.s32 %s20, 2
        // Predicated region
        $region273: #{tpu_custom_call.1} parent=271 // pred_check
          %p495 = pneg %p89
        $region274: #{tpu_custom_call.1} parent=271 // pred_check_branch
          %497 = sbr.rel (%p495) target = $region276
        $region275: #{tpu_custom_call.1} parent=271 // pred_region
          %s498 = sand.u32 %s74, 1
          %s499 = scalar_lea.sflag [#allocation7], %s498
          %s500 = sand.u32 %s74, 1
          %s501 = smul.addr %s500, 8
          %s502 = scalar_lea.vmem [#allocation6], %s501
          %504 = dma.done %s499, 128
        $region276: #{tpu_custom_call.1} parent=271 // pred_fallthru
          _
      $region272: #{tpu_custom_call.1} parent=5 // pred_fallthru
        _
    $region6: #{tpu_custom_call.1} parent=1 // loop_footer
      %s24 = sadd.s32 1, %s20
    $region7: #{tpu_custom_call.1} parent=1 // loop_footer_branch
      %19 = sbr.rel target = $region3
    $region8: #{tpu_custom_call.1} parent=1 // loop_exit
      _
    %505 = vsyncpa [#allocation7], 1
    %s506 = scalar_lea.sflag [#allocation7], 1
    %507 = vsyncpa %s506, 1
  %508 = vsyncmov [#allocation3]
  %s509 = vpop.sfrf %508
  %p510 = scmp.eq.s32.totalorder %s509, 0
  %p511 = pneg %p510
  %513 = shalt.err (%p511)
  %s514 = scalar_lea.sflag [#allocation3], 1
  %515 = vsyncmov %s514
  %s516 = vpop.sfrf %515
  %p517 = scmp.eq.s32.totalorder %s516, 0
  %p518 = pneg %p517
  %520 = shalt.err (%p518)
  %s521 = scalar_lea.sflag [#allocation3], 2
  %522 = vsyncmov %s521
  %s523 = vpop.sfrf %522
  %p524 = scmp.eq.s32.totalorder %s523, 0
  %p525 = pneg %p524
  %527 = shalt.err (%p525)
  %s528 = scalar_lea.sflag [#allocation3], 3
  %529 = vsyncmov %s528
  %s530 = vpop.sfrf %529
  %p531 = scmp.eq.s32.totalorder %s530, 0
  %p532 = pneg %p531
  %534 = shalt.err (%p532)
  %s535 = scalar_lea.sflag [#allocation3], 4
  %536 = vsyncmov %s535
  %s537 = vpop.sfrf %536
  %p538 = scmp.eq.s32.totalorder %s537, 0
  %p539 = pneg %p538
  %541 = shalt.err (%p539)
  %s542 = scalar_lea.sflag [#allocation3], 5
  %543 = vsyncmov %s542
  %s544 = vpop.sfrf %543
  %p545 = scmp.eq.s32.totalorder %s544, 0
  %p546 = pneg %p545
  %548 = shalt.err (%p546)
  %s549 = scalar_lea.sflag [#allocation3], 6
  %550 = vsyncmov %s549
  %s551 = vpop.sfrf %550
  %p552 = scmp.eq.s32.totalorder %s551, 0
  %p553 = pneg %p552
  %555 = shalt.err (%p553)
  %s556 = scalar_lea.sflag [#allocation3], 7
  %557 = vsyncmov %s556
  %s558 = vpop.sfrf %557
  %p559 = scmp.eq.s32.totalorder %s558, 0
  %p560 = pneg %p559
  %562 = shalt.err (%p560)

</llo_original>
